<compile_context>
chip_gen: v7x
topology: tpu7x:2x2x1
jax: 0.10.0
libtpu: 0.0.40
codegen_flags: <defaults>
</compile_context>

<pallas_src>
import math

import jax
import jax.numpy as jnp
from jax.experimental import pallas as pl
from jax.experimental.pallas import tpu as pltpu

LANES = 128
SUBLANES = 8
NUM_PARTIALS = 2                      # leading "parallel" grid axis
CHUNK_ROWS = 256                      # rows per inner fori_loop chunk
MAX_TILE_ROWS = 8192                  # 8192*128*4B = 4 MiB f32 per input block
TILE_BYTES_BUDGET = 20 * 1024 * 1024  # double-buffered p+t input blocks


def _cdiv(a: int, b: int) -> int:
    return -(-a // b)


def _make_kernel(tile_rows: int, chunk_rows: int):
    n_chunks = tile_rows // chunk_rows

    def kernel(p_ref, t_ref, out_ref):
        i = pl.program_id(1)

        @pl.when(i == 0)
        def _():
            out_ref[...] = jnp.zeros_like(out_ref)

        def fold(x):
            # (chunk_rows, 128) -> (8, 128): pure VPU adds, no cross-lane XLU.
            return x.reshape(chunk_rows // SUBLANES, SUBLANES, LANES).sum(axis=0)

        def body(c, carry):
            bce_a, pt_a, p_a, t_a = carry
            r0 = pl.multiple_of(c * chunk_rows, chunk_rows)
            p = p_ref[pl.ds(r0, chunk_rows), :].astype(jnp.float32)
            t = t_ref[pl.ds(r0, chunk_rows), :].astype(jnp.float32)
            pt = p * t
            # Numerically stable BCE-with-logits (PyTorch formulation):
            #   max(x, 0) - x*t + log1p(exp(-|x|))
            bce = jnp.maximum(p, 0.0) - pt + jnp.log1p(jnp.exp(-jnp.abs(p)))
            return (bce_a + fold(bce), pt_a + fold(pt),
                    p_a + fold(p), t_a + fold(t))

        zero = jnp.zeros((SUBLANES, LANES), jnp.float32)
        bce_s, pt_s, p_s, t_s = jax.lax.fori_loop(
            0, n_chunks, body, (zero, zero, zero, zero))

        # Accumulate straight into the resident output block (constant block
        # index across the inner "arbitrary" axis -> stays in VMEM).
        out_ref[0, 0] += bce_s
        out_ref[0, 1] += pt_s
        out_ref[0, 2] += p_s
        out_ref[0, 3] += t_s

    return kernel


def _partial_sums_dense(p, t):
    """Fused jnp reduction for the small ragged remainder (no copies)."""
    p = p.astype(jnp.float32)
    t = t.astype(jnp.float32)
    pt = p * t
    bce = jnp.maximum(p, 0.0) - pt + jnp.log1p(jnp.exp(-jnp.abs(p)))
    return jnp.sum(bce), jnp.sum(pt), jnp.sum(p), jnp.sum(t)


def bce_dice_loss(predict: jax.Array, target: jax.Array) -> jax.Array:
    """Pallas TPU implementation of BCEDiceLoss.forward (NCHW inputs)."""
    assert predict.shape == target.shape
    n = predict.size
    assert n > 0

    p_flat = predict.reshape(-1)
    t_flat = target.reshape(-1)

    # Only when n is not a multiple of 128 do we pad (< 128 zeros). The only
    # semantic effect of the zeros is +log(2) each on the BCE sum, corrected
    # below as a scalar; p/t/p*t sums are untouched. Rare for NCHW tensors.
    lane_pad = (-n) % LANES
    if lane_pad:
        p_flat = jnp.pad(p_flat, (0, lane_pad))
        t_flat = jnp.pad(t_flat, (0, lane_pad))
    rows = (n + lane_pad) // LANES
    p2d = p_flat.reshape(rows, LANES)   # zero-copy reshape (bitcast)
    t2d = t_flat.reshape(rows, LANES)

    # ---- grid over the largest block-aligned prefix (no extra padding) ----
    min_itemsize = min(predict.dtype.itemsize, target.dtype.itemsize)
    row_align = max(SUBLANES, 32 // max(1, min_itemsize))
    itembytes = predict.dtype.itemsize + target.dtype.itemsize
    max_tile_rows = min(
        MAX_TILE_ROWS,
        max(CHUNK_ROWS,
            (TILE_BYTES_BUDGET // (2 * LANES * itembytes)) // CHUNK_ROWS * CHUNK_ROWS))

    per_part = rows // NUM_PARTIALS
    steps = max(1, _cdiv(max(per_part, 1), max_tile_rows))
    per_step = rows // (NUM_PARTIALS * steps)
    if per_step >= CHUNK_ROWS:
        tile_rows = per_step // CHUNK_ROWS * CHUNK_ROWS
        chunk_rows = CHUNK_ROWS
    else:
        tile_rows = per_step // row_align * row_align
        chunk_rows = tile_rows
    rows_main = NUM_PARTIALS * steps * tile_rows if tile_rows >= row_align else 0

    bce_s = jnp.float32(0.0)
    pt_s = jnp.float32(0.0)
    p_s = jnp.float32(0.0)
    t_s = jnp.float32(0.0)

    if rows_main > 0:
        n_main = rows_main * LANES
        cost = pl.CostEstimate(
            flops=12 * n_main,
            transcendentals=2 * n_main,
            bytes_accessed=itembytes * n_main
            + NUM_PARTIALS * 4 * SUBLANES * LANES * 4,
        )
        partials = pl.pallas_call(
            _make_kernel(tile_rows, chunk_rows),
            out_shape=jax.ShapeDtypeStruct(
                (NUM_PARTIALS, 4, SUBLANES, LANES), jnp.float32),
            grid_spec=pltpu.PrefetchScalarGridSpec(
                num_scalar_prefetch=0,
                grid=(NUM_PARTIALS, steps),
                in_specs=[
                    pl.BlockSpec((tile_rows, LANES), lambda c, i: (c * steps + i, 0)),
                    pl.BlockSpec((tile_rows, LANES), lambda c, i: (c * steps + i, 0)),
                ],
                out_specs=pl.BlockSpec(
                    (1, 4, SUBLANES, LANES), lambda c, i: (c, 0, 0, 0)),
            ),
            compiler_params=pltpu.CompilerParams(
                dimension_semantics=("parallel", "arbitrary"),
                vmem_limit_bytes=32 * 1024 * 1024,
            ),
            cost_estimate=cost,
        )(p2d, t2d)
        sums = partials.sum(axis=(0, 2, 3))   # (4,) = [bce, p*t, p, t]
        bce_s, pt_s, p_s, t_s = sums[0], sums[1], sums[2], sums[3]

    # Ragged row remainder (small, fuses into XLA elementwise + reduce).
    if rows_main < rows:
        tb, tpt, tp, tt = _partial_sums_dense(p2d[rows_main:], t2d[rows_main:])
        bce_s = bce_s + tb
        pt_s = pt_s + tpt
        p_s = p_s + tp
        t_s = t_s + tt

    if lane_pad:
        # Each padded zero contributes bce(0, 0) = log(2); remove it.
        bce_s = bce_s - jnp.float32(lane_pad * math.log(2.0))

    smooth = 1e-05
    bce_mean = bce_s / float(n)
    dice_score = (2.0 * pt_s + smooth) / (p_s + t_s + smooth)
    dice_loss = 1.0 - dice_score
    return 0.5 * bce_mean + dice_loss


def _reference(predict, target):
    p = predict.astype(jnp.float32).reshape(-1)
    t = target.astype(jnp.float32).reshape(-1)
    bce = jnp.mean(jnp.maximum(p, 0.0) - p * t + jnp.log1p(jnp.exp(-jnp.abs(p))))
    smooth = 1e-05
    inter = jnp.sum(p * t)
    union = jnp.sum(p) + jnp.sum(t)
    dice = (2.0 * inter + smooth) / (union + smooth)
    return 0.5 * bce + (1.0 - dice)


if __name__ == "__main__":
    key = jax.random.PRNGKey(0)
    k1, k2, k3, k4, k5, k6 = jax.random.split(key, 6)

    # NCHW: batch=2, channels=4, spatial=16x16 (n % 128 == 0 -> zero-copy path).
    predict = jax.random.normal(k1, (2, 4, 16, 16), dtype=jnp.float32)
    target = (jax.random.uniform(k2, (2, 4, 16, 16)) > 0.5).astype(jnp.float32)
    loss = bce_dice_loss(predict, target)
    jax.block_until_ready(loss)
    ref = _reference(predict, target)
    assert jnp.allclose(loss, ref, rtol=1e-5, atol=1e-5), (loss, ref)

    # Ragged size: kernel prefix + jnp row-tail + lane-pad log(2) correction.
    predict2 = jax.random.normal(k3, (3, 4, 33, 33), dtype=jnp.float32)
    target2 = (jax.random.uniform(k4, (3, 4, 33, 33)) > 0.5).astype(jnp.float32)
    loss2 = bce_dice_loss(predict2, target2)
    jax.block_until_ready(loss2)
    ref2 = _reference(predict2, target2)
    assert jnp.allclose(loss2, ref2, rtol=1e-5, atol=1e-5), (loss2, ref2)

    # Tiny ragged size (too small for a block: pure fused-jnp fallback path).
    predict3 = jax.random.normal(k5, (3, 5, 7, 11), dtype=jnp.float32)
    target3 = (jax.random.uniform(k6, (3, 5, 7, 11)) > 0.5).astype(jnp.float32)
    loss3 = bce_dice_loss(predict3, target3)
    jax.block_until_ready(loss3)
    ref3 = _reference(predict3, target3)
    assert jnp.allclose(loss3, ref3, rtol=1e-5, atol=1e-5), (loss3, ref3)

    print("KERNEL_OK")
</pallas_src>

<mosaic_0001>
module attributes {stable_mosaic.version = 11 : i64} {
  func.func @kernel(%arg0: i32, %arg1: i32, %arg2: memref<8x128xf32, #tpu.memory_space<vmem>>, %arg3: memref<8x128xf32, #tpu.memory_space<vmem>>, %arg4: memref<1x4x8x128xf32, #tpu.memory_space<vmem>>) attributes {dimension_semantics = [#tpu.dimension_semantics<parallel>, #tpu.dimension_semantics<arbitrary>], iteration_bounds = array<i64: 2, 1>, scalar_prefetch = 0 : i64, scratch_operands = 0 : i64, tpu.core_type = #tpu.core_type<tc>, window_params = [{transform_indices = @transform_0, window_bounds = array<i64: 8, 128>}, {transform_indices = @transform_1, window_bounds = array<i64: 8, 128>}, {transform_indices = @transform_2, window_bounds = array<i64: 1, 4, 8, 128>}]} {
    %c0_i32 = arith.constant 0 : i32
    %0 = arith.cmpi eq, %arg1, %c0_i32 : i32
    %1 = arith.extui %0 : i1 to i32
    %c0_i32_0 = arith.constant 0 : i32
    %2 = arith.cmpi ne, %1, %c0_i32_0 : i32
    scf.if %2 {
      %cst_38 = arith.constant 0.000000e+00 : f32
      %56 = vector.broadcast %cst_38 : f32 to vector<1x4x8x128xf32>
      %c0_39 = arith.constant 0 : index
      %c0_40 = arith.constant 0 : index
      %c0_41 = arith.constant 0 : index
      %c0_42 = arith.constant 0 : index
      %57 = vector.load %arg4[%c0_39, %c0_40, %c0_41, %c0_42] : memref<1x4x8x128xf32, #tpu.memory_space<vmem>>, vector<1x4x8x128xf32>
      tpu.vector_store %arg4[%c0_39, %c0_40, %c0_41, %c0_42], %56 {strides = array<i32>} : memref<1x4x8x128xf32, #tpu.memory_space<vmem>>, vector<1x4x8x128xf32>,
    } else {
    }
    %cst = arith.constant 0.000000e+00 : f32
    %3 = vector.broadcast %cst : f32 to vector<8x128xf32>
    %c0_i32_1 = arith.constant 0 : i32
    %c8_i32 = arith.constant 8 : i32
    %4 = arith.muli %c0_i32_1, %c8_i32 : i32
    %5 = tpu.assume_multiple %4, 8 : i32
    %6 = arith.index_cast %5 : i32 to index
    %c0 = arith.constant 0 : index
    %7 = vector.load %arg2[%6, %c0] : memref<8x128xf32, #tpu.memory_space<vmem>>, vector<8x128xf32>
    %8 = arith.index_cast %5 : i32 to index
    %c0_2 = arith.constant 0 : index
    %9 = vector.load %arg3[%8, %c0_2] : memref<8x128xf32, #tpu.memory_space<vmem>>, vector<8x128xf32>
    %10 = arith.mulf %7, %9 : vector<8x128xf32>
    %cst_3 = arith.constant 0.000000e+00 : f32
    %11 = vector.broadcast %cst_3 : f32 to vector<8x128xf32>
    %12 = arith.maximumf %7, %11 : vector<8x128xf32>
    %13 = arith.subf %12, %10 : vector<8x128xf32>
    %14 = math.absf %7 : vector<8x128xf32>
    %cst_4 = arith.constant 0.000000e+00 : f32
    %15 = vector.broadcast %cst_4 : f32 to vector<8x128xf32>
    %16 = arith.subf %15, %14 : vector<8x128xf32>
    %17 = math.exp %16 : vector<8x128xf32>
    %18 = math.log1p %17 : vector<8x128xf32>
    %19 = arith.addf %13, %18 : vector<8x128xf32>
    %20 = vector.shape_cast %19 : vector<8x128xf32> to vector<1x8x128xf32>
    %cst_5 = arith.constant dense<0.000000e+00> : vector<8x128xf32>
    %21 = vector.multi_reduction <add>, %20, %cst_5 [0] : vector<1x8x128xf32> to vector<8x128xf32>
    %22 = arith.addf %3, %21 : vector<8x128xf32>
    %23 = vector.shape_cast %10 : vector<8x128xf32> to vector<1x8x128xf32>
    %cst_6 = arith.constant dense<0.000000e+00> : vector<8x128xf32>
    %24 = vector.multi_reduction <add>, %23, %cst_6 [0] : vector<1x8x128xf32> to vector<8x128xf32>
    %25 = arith.addf %3, %24 : vector<8x128xf32>
    %26 = vector.shape_cast %7 : vector<8x128xf32> to vector<1x8x128xf32>
    %cst_7 = arith.constant dense<0.000000e+00> : vector<8x128xf32>
    %27 = vector.multi_reduction <add>, %26, %cst_7 [0] : vector<1x8x128xf32> to vector<8x128xf32>
    %28 = arith.addf %3, %27 : vector<8x128xf32>
    %29 = vector.shape_cast %9 : vector<8x128xf32> to vector<1x8x128xf32>
    %cst_8 = arith.constant dense<0.000000e+00> : vector<8x128xf32>
    %30 = vector.multi_reduction <add>, %29, %cst_8 [0] : vector<1x8x128xf32> to vector<8x128xf32>
    %31 = arith.addf %3, %30 : vector<8x128xf32>
    %c1_i32 = arith.constant 1 : i32
    %c0_9 = arith.constant 0 : index
    %c0_10 = arith.constant 0 : index
    %c0_11 = arith.constant 0 : index
    %c0_12 = arith.constant 0 : index
    %32 = vector.load %arg4[%c0_9, %c0_10, %c0_11, %c0_12] : memref<1x4x8x128xf32, #tpu.memory_space<vmem>>, vector<1x1x8x128xf32>
    %33 = vector.shape_cast %32 : vector<1x1x8x128xf32> to vector<8x128xf32>
    %34 = arith.addf %33, %22 : vector<8x128xf32>
    %c0_13 = arith.constant 0 : index
    %c0_14 = arith.constant 0 : index
    %c0_15 = arith.constant 0 : index
    %c0_16 = arith.constant 0 : index
    %35 = vector.load %arg4[%c0_13, %c0_14, %c0_15, %c0_16] : memref<1x4x8x128xf32, #tpu.memory_space<vmem>>, vector<1x1x8x128xf32>
    %36 = vector.shape_cast %35 : vector<1x1x8x128xf32> to vector<8x128xf32>
    %37 = vector.shape_cast %34 : vector<8x128xf32> to vector<1x1x8x128xf32>
    tpu.vector_store %arg4[%c0_13, %c0_14, %c0_15, %c0_16], %37 {strides = array<i32>} : memref<1x4x8x128xf32, #tpu.memory_space<vmem>>, vector<1x1x8x128xf32>,
    %c0_17 = arith.constant 0 : index
    %c1 = arith.constant 1 : index
    %c0_18 = arith.constant 0 : index
    %c0_19 = arith.constant 0 : index
    %38 = vector.load %arg4[%c0_17, %c1, %c0_18, %c0_19] : memref<1x4x8x128xf32, #tpu.memory_space<vmem>>, vector<1x1x8x128xf32>
    %39 = vector.shape_cast %38 : vector<1x1x8x128xf32> to vector<8x128xf32>
    %40 = arith.addf %39, %25 : vector<8x128xf32>
    %c0_20 = arith.constant 0 : index
    %c1_21 = arith.constant 1 : index
    %c0_22 = arith.constant 0 : index
    %c0_23 = arith.constant 0 : index
    %41 = vector.load %arg4[%c0_20, %c1_21, %c0_22, %c0_23] : memref<1x4x8x128xf32, #tpu.memory_space<vmem>>, vector<1x1x8x128xf32>
    %42 = vector.shape_cast %41 : vector<1x1x8x128xf32> to vector<8x128xf32>
    %43 = vector.shape_cast %40 : vector<8x128xf32> to vector<1x1x8x128xf32>
    tpu.vector_store %arg4[%c0_20, %c1_21, %c0_22, %c0_23], %43 {strides = array<i32>} : memref<1x4x8x128xf32, #tpu.memory_space<vmem>>, vector<1x1x8x128xf32>,
    %c0_24 = arith.constant 0 : index
    %c2 = arith.constant 2 : index
    %c0_25 = arith.constant 0 : index
    %c0_26 = arith.constant 0 : index
    %44 = vector.load %arg4[%c0_24, %c2, %c0_25, %c0_26] : memref<1x4x8x128xf32, #tpu.memory_space<vmem>>, vector<1x1x8x128xf32>
    %45 = vector.shape_cast %44 : vector<1x1x8x128xf32> to vector<8x128xf32>
    %46 = arith.addf %45, %28 : vector<8x128xf32>
    %c0_27 = arith.constant 0 : index
    %c2_28 = arith.constant 2 : index
    %c0_29 = arith.constant 0 : index
    %c0_30 = arith.constant 0 : index
    %47 = vector.load %arg4[%c0_27, %c2_28, %c0_29, %c0_30] : memref<1x4x8x128xf32, #tpu.memory_space<vmem>>, vector<1x1x8x128xf32>
    %48 = vector.shape_cast %47 : vector<1x1x8x128xf32> to vector<8x128xf32>
    %49 = vector.shape_cast %46 : vector<8x128xf32> to vector<1x1x8x128xf32>
    tpu.vector_store %arg4[%c0_27, %c2_28, %c0_29, %c0_30], %49 {strides = array<i32>} : memref<1x4x8x128xf32, #tpu.memory_space<vmem>>, vector<1x1x8x128xf32>,
    %c0_31 = arith.constant 0 : index
    %c3 = arith.constant 3 : index
    %c0_32 = arith.constant 0 : index
    %c0_33 = arith.constant 0 : index
    %50 = vector.load %arg4[%c0_31, %c3, %c0_32, %c0_33] : memref<1x4x8x128xf32, #tpu.memory_space<vmem>>, vector<1x1x8x128xf32>
    %51 = vector.shape_cast %50 : vector<1x1x8x128xf32> to vector<8x128xf32>
    %52 = arith.addf %51, %31 : vector<8x128xf32>
    %c0_34 = arith.constant 0 : index
    %c3_35 = arith.constant 3 : index
    %c0_36 = arith.constant 0 : index
    %c0_37 = arith.constant 0 : index
    %53 = vector.load %arg4[%c0_34, %c3_35, %c0_36, %c0_37] : memref<1x4x8x128xf32, #tpu.memory_space<vmem>>, vector<1x1x8x128xf32>
    %54 = vector.shape_cast %53 : vector<1x1x8x128xf32> to vector<8x128xf32>
    %55 = vector.shape_cast %52 : vector<8x128xf32> to vector<1x1x8x128xf32>
    tpu.vector_store %arg4[%c0_34, %c3_35, %c0_36, %c0_37], %55 {strides = array<i32>} : memref<1x4x8x128xf32, #tpu.memory_space<vmem>>, vector<1x1x8x128xf32>,
    return
  }
  func.func @transform_0(%arg0: i32, %arg1: i32) -> (i32, i32) {
    %c1_i32 = arith.constant 1 : i32
    %0 = arith.muli %arg0, %c1_i32 : i32
    %1 = arith.addi %0, %arg1 : i32
    %c0_i32 = arith.constant 0 : i32
    %c0_i32_0 = arith.constant 0 : i32
    return %1, %c0_i32 : i32, i32
  }
  func.func @transform_1(%arg0: i32, %arg1: i32) -> (i32, i32) {
    %c1_i32 = arith.constant 1 : i32
    %0 = arith.muli %arg0, %c1_i32 : i32
    %1 = arith.addi %0, %arg1 : i32
    %c0_i32 = arith.constant 0 : i32
    %c0_i32_0 = arith.constant 0 : i32
    return %1, %c0_i32 : i32, i32
  }
  func.func @transform_2(%arg0: i32, %arg1: i32) -> (i32, i32, i32, i32) {
    %c0_i32 = arith.constant 0 : i32
    %c0_i32_0 = arith.constant 0 : i32
    %c0_i32_1 = arith.constant 0 : i32
    %c0_i32_2 = arith.constant 0 : i32
    return %arg0, %c0_i32, %c0_i32_0, %c0_i32_1 : i32, i32, i32, i32
  }
}

</mosaic_0001>

<llo_original>
// kernel: tpu_custom_call.1
$region0: #{tpu_custom_call.1}
  #allocation0 [shape = 'u32[]', space=smem, size = 0x4, offset = 0x4, fixed_abs, tag = 'smem constant byte address 0x4 - core index']
  #allocation1 [shape = 'u32[144,128]{1,0:T(1,128)}', space=vmem, size = 0x12000, scoped, tag = 'internal scratch']
  %s0 = inlined_call_operand.hbm [shape: f32[16,128], index: 0, kind: input, shape index: {}]
  %s1 = inlined_call_operand.hbm [shape: f32[16,128], index: 1, kind: input, shape index: {}]
  %s2 = inlined_call_operand.hbm [shape: f32[2,4,8,128], index: 2, kind: output, shape index: {}]
  %s3 = sld [smem:[#allocation0]]
  $region53: #{tpu_custom_call.1} parent=0
    _
  %s5 = ssub.s32 1, %s3
  %s6 = scalar_select 0, %s5, %s3
  $region1: #{tpu_custom_call.1} parent=0
    #allocation2 [shape = 'u8[8192]{0}', space=vmem, size = 0x2000, scoped, tag = 'input window, operand 0']
    #allocation3 [shape = 's32[2]{0}', space=sflag, size = 0x8, scoped, tag = 'scoped memory for tpu_custom_call.1']
    #allocation4 [shape = 's32[2]{0}', space=sflag, size = 0x8, scoped, tag = 'scoped memory for tpu_custom_call.1']
    #allocation5 [shape = 'u8[8192]{0}', space=vmem, size = 0x2000, scoped, tag = 'input window, operand 1']
    #allocation6 [shape = 's32[2]{0}', space=sflag, size = 0x8, scoped, tag = 'scoped memory for tpu_custom_call.1']
    #allocation7 [shape = 'u8[32768]{0}', space=vmem, size = 0x8000, scoped, tag = 'output window, operand 0']
    %7 = vsyncpa [#allocation3], 0
    %s8 = scalar_lea.sflag [#allocation3], 1
    %9 = vsyncpa %s8, 0
    %10 = vsyncpa [#allocation6], 0
    %s11 = scalar_lea.sflag [#allocation6], 1
    %12 = vsyncpa %s11, 0
    %13 = vsyncpa [#allocation4], 0
    %s14 = scalar_lea.sflag [#allocation4], 1
    %15 = vsyncpa %s14, 0
    loop: start=0, step=1, limit=4
    $region2: #{tpu_custom_call.1} parent=1 // loop_pre_header
      _
    $region3: #{tpu_custom_call.1} parent=1 // loop_header
      %s17 = sphi 0, %s21
      %p18 = scmp.ge.s32.totalorder %s17, 4
      %s24 = sphi 0, %s36
      %s25 = sphi 0, %s32
      %s26 = sphi 0, %s24
      %s27 = sphi 0, %s25
      %s28 = sphi 0, %s26
      %s29 = sphi 0, %s27
      %s41 = sphi 0, %s43
      %s44 = sphi 0, %s41
      %s45 = sphi 0, %s44
      %s61 = sphi 0, %s45
      %s69 = sphi 0, %s71
      %s72 = sphi 0, %s69
      %s73 = sphi 0, %s72
      %s89 = sphi 0, %s73
      %s95 = sphi 0, %s97
      %s98 = sphi 0, %s95
      %s99 = sphi 0, %s98
      %s115 = sphi 0, %s99
    $region4: #{tpu_custom_call.1} parent=1 // loop_header_branch
      %20 = sbr.rel (%p18) target = $region8
    $region5: #{tpu_custom_call.1} parent=1 // loop_body
      %s22 = ssub.s32 %s17, 1
      %s23 = ssub.s32 %s17, 2
      %s30 = sadd.s32 1, %s25
      %p31 = scmp.ge.s32.totalorder %s30, 1
      %s32 = scalar_select %p31, 0, %s30
      %s33 = sadd.s32 1, %s24
      %s34 = scalar_select %p31, %s33, %s24
      %p35 = scmp.ge.s32.totalorder %s34, 2
      %s36 = scalar_select %p35, 0, %s34
      %s37 = sadd.s32 %s24, %s25
      %s38 = sadd.s32 %s36, %s32
      %s39 = ssub.s32 %s37, %s38
      %p40 = scmp.eq.s32.totalorder %s39, 0
      %s42 = sadd.s32 %s41, 1
      %s43 = scalar_select %p40, %s41, %s42
      %p46 = pneg %p40
      %p47 = scmp.eq.s32.totalorder %s17, 1
      %p48 = por %p46, %p47
      %p49 = scmp.ne.s32.totalorder %s41, %s44
      %p50 = scmp.eq.s32.totalorder %s17, 0
      %p51 = por %p49, %p50
      %p52 = scmp.ne.s32.totalorder %s41, %s44
      %p53 = scmp.eq.s32.totalorder %s22, 1
      %p54 = por %p52, %p53
      %p55 = scmp.ne.s32.totalorder %s44, %s45
      %p56 = scmp.eq.s32.totalorder %s22, 0
      %p57 = por %p55, %p56
      %p58 = scmp.ne.s32.totalorder %s44, %s45
      %p59 = scmp.eq.s32.totalorder %s23, 1
      %p60 = por %p58, %p59
      %p62 = scmp.ne.s32.totalorder %s45, %s61
      %p63 = scmp.eq.s32.totalorder %s23, 0
      %p64 = por %p62, %p63
      %s65 = sadd.s32 %s24, %s25
      %s66 = sadd.s32 %s36, %s32
      %s67 = ssub.s32 %s65, %s66
      %p68 = scmp.eq.s32.totalorder %s67, 0
      %s70 = sadd.s32 %s69, 1
      %s71 = scalar_select %p68, %s69, %s70
      %p74 = pneg %p68
      %p75 = scmp.eq.s32.totalorder %s17, 1
      %p76 = por %p74, %p75
      %p77 = scmp.ne.s32.totalorder %s69, %s72
      %p78 = scmp.eq.s32.totalorder %s17, 0
      %p79 = por %p77, %p78
      %p80 = scmp.ne.s32.totalorder %s69, %s72
      %p81 = scmp.eq.s32.totalorder %s22, 1
      %p82 = por %p80, %p81
      %p83 = scmp.ne.s32.totalorder %s72, %s73
      %p84 = scmp.eq.s32.totalorder %s22, 0
      %p85 = por %p83, %p84
      %p86 = scmp.ne.s32.totalorder %s72, %s73
      %p87 = scmp.eq.s32.totalorder %s23, 1
      %p88 = por %p86, %p87
      %p90 = scmp.ne.s32.totalorder %s73, %s89
      %p91 = scmp.eq.s32.totalorder %s23, 0
      %p92 = por %p90, %p91
      %s93 = ssub.s32 %s24, %s36
      %p94 = scmp.eq.s32.totalorder %s93, 0
      %s96 = sadd.s32 %s95, 1
      %s97 = scalar_select %p94, %s95, %s96
      %p100 = pneg %p94
      %p101 = scmp.eq.s32.totalorder %s17, 1
      %p102 = por %p100, %p101
      %p103 = scmp.ne.s32.totalorder %s95, %s98
      %p104 = scmp.eq.s32.totalorder %s17, 0
      %p105 = por %p103, %p104
      %p106 = scmp.ne.s32.totalorder %s95, %s98
      %p107 = scmp.eq.s32.totalorder %s22, 1
      %p108 = por %p106, %p107
      %p109 = scmp.ne.s32.totalorder %s98, %s99
      %p110 = scmp.eq.s32.totalorder %s22, 0
      %p111 = por %p109, %p110
      %p112 = scmp.ne.s32.totalorder %s98, %s99
      %p113 = scmp.eq.s32.totalorder %s23, 1
      %p114 = por %p112, %p113
      %p116 = scmp.ne.s32.totalorder %s99, %s115
      %p117 = scmp.eq.s32.totalorder %s23, 0
      %p118 = por %p116, %p117
      %p119 = scmp.le.s32.totalorder 1, %s17
      %p120 = scmp.lt.s32.totalorder %s17, 3
      %p121 = pnand %p119, %p120
      %p122 = pneg %p121
      // Predicated region
      $region9: #{tpu_custom_call.1} parent=5 // pred_check
        _
      $region10: #{tpu_custom_call.1} parent=5 // pred_check_branch
        %124 = sbr.rel (%p121) target = $region12
      $region11: #{tpu_custom_call.1} parent=5 // pred_region
        %s125 = ssub.s32 %s17, 1
      $region12: #{tpu_custom_call.1} parent=5 // pred_fallthru
        _
      %p126 = scmp.lt.s32.totalorder %s17, 2
      // Predicated region
      $region13: #{tpu_custom_call.1} parent=5 // pred_check
        %p127 = pneg %p126
      $region14: #{tpu_custom_call.1} parent=5 // pred_check_branch
        %129 = sbr.rel (%p127) target = $region16
      $region15: #{tpu_custom_call.1} parent=5 // pred_region
        // Predicated region
        $region17: #{tpu_custom_call.1} parent=15 // pred_check
          %p130 = pneg %p51
        $region18: #{tpu_custom_call.1} parent=15 // pred_check_branch
          %132 = sbr.rel (%p130) target = $region20
        $region19: #{tpu_custom_call.1} parent=15 // pred_region
          %s133 = sand.u32 %s41, 1
          %s134 = scalar_lea.sflag [#allocation3], %s133
          %s135 = sand.u32 %s41, 1
          %s136 = smul.addr %s135, 8
          %s137 = scalar_lea.vmem [#allocation2], %s136
          %s138 = sadd.s32 %s24, %s25
          %s140 = ssub.s32 128, 128
          %141 = vsyncadd %s134, %s140
          %s142 = smul.addr %s138, 128
          %s143 = scalar_lea.hbm %s0, %s142
          %s145 = sshll.u32 %s137, 4
          %s146 = int_to_ptr.vmem [resolvable:$true] %s145
          %148 = dma.hbm_to_vmem [thread:$0]  %s143, 128, %s146, %s134
        $region20: #{tpu_custom_call.1} parent=15 // pred_fallthru
          _
        // Predicated region
        $region21: #{tpu_custom_call.1} parent=15 // pred_check
          %p149 = pneg %p79
        $region22: #{tpu_custom_call.1} parent=15 // pred_check_branch
          %151 = sbr.rel (%p149) target = $region24
        $region23: #{tpu_custom_call.1} parent=15 // pred_region
          %s152 = sand.u32 %s69, 1
          %s153 = scalar_lea.sflag [#allocation6], %s152
          %s154 = sand.u32 %s69, 1
          %s155 = smul.addr %s154, 8
          %s156 = scalar_lea.vmem [#allocation5], %s155
          %s157 = sadd.s32 %s24, %s25
          %s159 = ssub.s32 128, 128
          %160 = vsyncadd %s153, %s159
          %s161 = smul.addr %s157, 128
          %s162 = scalar_lea.hbm %s1, %s161
          %s164 = sshll.u32 %s156, 4
          %s165 = int_to_ptr.vmem [resolvable:$true] %s164
          %167 = dma.hbm_to_vmem [thread:$0]  %s162, 128, %s165, %s153
        $region24: #{tpu_custom_call.1} parent=15 // pred_fallthru
          _
      $region16: #{tpu_custom_call.1} parent=5 // pred_fallthru
        _
      %p168 = scmp.le.s32.totalorder 1, %s17
      %p169 = scmp.lt.s32.totalorder %s17, 3
      %p170 = pnand %p168, %p169
      %p171 = pneg %p170
      // Predicated region
      $region25: #{tpu_custom_call.1} parent=5 // pred_check
        _
      $region26: #{tpu_custom_call.1} parent=5 // pred_check_branch
        %173 = sbr.rel (%p170) target = $region28
      $region27: #{tpu_custom_call.1} parent=5 // pred_region
        %s174 = ssub.s32 %s17, 1
        %s175 = sand.u32 %s44, 1
        %s176 = scalar_lea.sflag [#allocation3], %s175
        %s177 = sand.u32 %s44, 1
        %s178 = smul.addr %s177, 8
        %s179 = scalar_lea.vmem [#allocation2], %s178
        // Predicated region
        $region29: #{tpu_custom_call.1} parent=27 // pred_check
          %p180 = pneg %p57
        $region30: #{tpu_custom_call.1} parent=27 // pred_check_branch
          %182 = sbr.rel (%p180) target = $region32
        $region31: #{tpu_custom_call.1} parent=27 // pred_region
          %183 = dma.done %s176, 128
        $region32: #{tpu_custom_call.1} parent=27 // pred_fallthru
          _
        %s184 = sand.u32 %s72, 1
        %s185 = scalar_lea.sflag [#allocation6], %s184
        %s186 = sand.u32 %s72, 1
        %s187 = smul.addr %s186, 8
        %s188 = scalar_lea.vmem [#allocation5], %s187
        // Predicated region
        $region33: #{tpu_custom_call.1} parent=27 // pred_check
          %p189 = pneg %p85
        $region34: #{tpu_custom_call.1} parent=27 // pred_check_branch
          %191 = sbr.rel (%p189) target = $region36
        $region35: #{tpu_custom_call.1} parent=27 // pred_region
          %192 = dma.done %s185, 128
        $region36: #{tpu_custom_call.1} parent=27 // pred_fallthru
          _
        %s193 = sand.u32 %s44, 1
        %s194 = scalar_lea.sflag [#allocation3], %s193
        %s195 = sand.u32 %s44, 1
        %s196 = smul.addr %s195, 8
        %s197 = scalar_lea.vmem [#allocation2], %s196
        %p198 = pneg %p57
        %p199 = pneg %p54
        %s200 = sand.u32 %s72, 1
        %s201 = scalar_lea.sflag [#allocation6], %s200
        %s202 = sand.u32 %s72, 1
        %s203 = smul.addr %s202, 8
        %s204 = scalar_lea.vmem [#allocation5], %s203
        %p205 = pneg %p85
        %p206 = pneg %p82
        %p207 = pneg %p111
        %p208 = pneg %p108
        %s209 = sand.u32 %s98, 1
        %s210 = scalar_lea.sflag [#allocation4], %s209
        %s211 = sand.u32 %s98, 1
        %s212 = smul.addr %s211, 32
        %s213 = scalar_lea.vmem [#allocation7], %s212
        %s214 = sadd.s32 %s26, %s27
        %s215 = sadd.s32 %s26, %s27
        %p216 = scmp.eq.s32.totalorder %s27, 0
        // Predicated region
        $region37: #{tpu_custom_call.1} parent=27 // pred_check
          %p217 = pneg %p216
        $region38: #{tpu_custom_call.1} parent=27 // pred_check_branch
          %219 = sbr.rel (%p217) target = $region40
        $region39: #{tpu_custom_call.1} parent=27 // pred_region
          %220 = vst [vmem:[%s213] sm:$0xff] 0.0
          %221 = vst [vmem:[%s213 + $0x8] sm:$0xff] 0.0
          %222 = vst [vmem:[%s213 + $0x10] sm:$0xff] 0.0
          %223 = vst [vmem:[%s213 + $0x18] sm:$0xff] 0.0
        $region40: #{tpu_custom_call.1} parent=27 // pred_fallthru
          _
        %v224 = vld [vmem:[%s179] sm:$0xff]
        %v225 = vld [vmem:[%s188] sm:$0xff]
        %v226 = vmul.f32 %v224, %v225
        %v227 = vmax.f32 %v224, 0.0
        %v228 = vsub.f32 %v227, %v226
        %v229 = vand.u32 2147483647, %v224
        %v230 = vsub.f32 0.0, %v229
        %v231 = vmul.f32 %v230, 1.442695
        %v232 = vpow.pop %v231
        %v233 = vadd.f32 %v232, 1.0
        %v234 = vlog2.pop %v233
        %v235 = vmul.f32 %v234, 0.6931472
        %v236 = vmul.f32 -0.5, %v232
        %v237 = vadd.f32 %v236, 1.0
        %v238 = vmul.f32 %v237, %v232
        %v239 = vand.u32 2147483647, %v232
        %vm240 = vcmp.lt.f32.partialorder %v239, 0.0004427343
        %v241 = vsel %vm240, %v238, %v235
        %v242 = vadd.f32 %v228, %v241
        %v243 = vadd.f32 %v242, 0.0
        %v244 = vadd.f32 %v243, 0.0
        %v245 = vadd.f32 %v226, 0.0
        %v246 = vadd.f32 %v245, 0.0
        %v247 = vadd.f32 %v224, 0.0
        %v248 = vadd.f32 %v247, 0.0
        %v249 = vadd.f32 %v225, 0.0
        %v250 = vadd.f32 %v249, 0.0
        %v251 = vld [vmem:[%s213] sm:$0xff]
        %v252 = vadd.f32 %v251, %v244
        %253 = vst [vmem:[%s213] sm:$0xff] %v252
        %s254 = scalar_lea.vmem %s213, 8 [#allocation7]
        %v255 = vld [vmem:[%s254] sm:$0xff]
        %v256 = vadd.f32 %v255, %v246
        %257 = vst [vmem:[%s254] sm:$0xff] %v256
        %s258 = scalar_lea.vmem %s213, 16 [#allocation7]
        %v259 = vld [vmem:[%s258] sm:$0xff]
        %v260 = vadd.f32 %v259, %v248
        %261 = vst [vmem:[%s258] sm:$0xff] %v260
        %s262 = scalar_lea.vmem %s213, 24 [#allocation7]
        %v263 = vld [vmem:[%s262] sm:$0xff]
        %v264 = vadd.f32 %v263, %v250
        %265 = vst [vmem:[%s262] sm:$0xff] %v264
        %s266 = sand.u32 %s98, 1
        %s267 = scalar_lea.sflag [#allocation4], %s266
        %s268 = sand.u32 %s98, 1
        %s269 = smul.addr %s268, 32
        %s270 = scalar_lea.vmem [#allocation7], %s269
        // Predicated region
        $region41: #{tpu_custom_call.1} parent=27 // pred_check
          %p271 = pneg %p108
        $region42: #{tpu_custom_call.1} parent=27 // pred_check_branch
          %273 = sbr.rel (%p271) target = $region44
        $region43: #{tpu_custom_call.1} parent=27 // pred_region
          %s275 = ssub.s32 512, 512
          %276 = vsyncadd %s267, %s275
          %s277 = smul.addr %s26, 4
          %s278 = smul.addr %s277, 128
          %s279 = scalar_lea.hbm %s2, %s278
          %s280 = sshll.u32 %s270, 4
          %s281 = int_to_ptr.vmem [resolvable:$true] %s280
          %286 = dma.vmem_to_hbm [thread:$0]  %s281, 512, %s279, %s267, 128, 128, 8
        $region44: #{tpu_custom_call.1} parent=27 // pred_fallthru
          _
      $region28: #{tpu_custom_call.1} parent=5 // pred_fallthru
        _
      %p287 = scmp.le.s32.totalorder 2, %s17
      // Predicated region
      $region45: #{tpu_custom_call.1} parent=5 // pred_check
        %p288 = pneg %p287
      $region46: #{tpu_custom_call.1} parent=5 // pred_check_branch
        %290 = sbr.rel (%p288) target = $region48
      $region47: #{tpu_custom_call.1} parent=5 // pred_region
        %s291 = ssub.s32 %s17, 2
        // Predicated region
        $region49: #{tpu_custom_call.1} parent=47 // pred_check
          %p292 = pneg %p114
        $region50: #{tpu_custom_call.1} parent=47 // pred_check_branch
          %294 = sbr.rel (%p292) target = $region52
        $region51: #{tpu_custom_call.1} parent=47 // pred_region
          %s295 = sand.u32 %s99, 1
          %s296 = scalar_lea.sflag [#allocation4], %s295
          %s297 = sand.u32 %s99, 1
          %s298 = smul.addr %s297, 32
          %s299 = scalar_lea.vmem [#allocation7], %s298
          %300 = dma.done %s296, 512
        $region52: #{tpu_custom_call.1} parent=47 // pred_fallthru
          _
      $region48: #{tpu_custom_call.1} parent=5 // pred_fallthru
        _
    $region6: #{tpu_custom_call.1} parent=1 // loop_footer
      %s21 = sadd.s32 1, %s17
    $region7: #{tpu_custom_call.1} parent=1 // loop_footer_branch
      %16 = sbr.rel target = $region3
    $region8: #{tpu_custom_call.1} parent=1 // loop_exit
      _
    %301 = vsyncpa [#allocation3], 1
    %s302 = scalar_lea.sflag [#allocation3], 1
    %303 = vsyncpa %s302, 1
    %304 = vsyncpa [#allocation6], 1
    %s305 = scalar_lea.sflag [#allocation6], 1
    %306 = vsyncpa %s305, 1
    %307 = vsyncpa [#allocation4], 1
    %s308 = scalar_lea.sflag [#allocation4], 1
    %309 = vsyncpa %s308, 1

</llo_original>
